<compile_context>
chip_gen: v7x
topology: tpu7x:2x2x1
jax: 0.10.0
libtpu: 0.0.40
codegen_flags: <defaults>
</compile_context>

<pallas_src>
import math
import functools

import jax
import jax.numpy as jnp
from jax.experimental import pallas as pl
from jax.experimental.pallas import tpu as pltpu

_LANE = 128
_MAX_LANE_MULT = 64              # widest last dim considered: 64 * 128 = 8192
_TARGET_TILE_BYTES = 4 << 20     # ~4 MiB per buffer -> <=16 MiB double-buffered


def _nr_reciprocal(d):
    """EUP approx reciprocal + one Newton-Raphson step (error << 1e-6 rel)."""
    r = pl.reciprocal(d, approx=True)
    return r * (2.0 - d * r)


def _bounded_exp_kernel(x_ref, o_ref, *, decay_constant, inv_region,
                        infinite_bound, log_bound):
    x = x_ref[...].astype(jnp.float32)
    z = x * inv_region
    z2 = z * z
    if decay_constant == 0:
        # (x/r)^0 == 1 exactly (matches torch.pow), so ratio = 1 / (1 + z^2).
        ratio = _nr_reciprocal(1.0 + z2)
    else:
        num = z2 ** decay_constant          # z^(2k) via even power of z^2
        den = 1.0 + num * z2                # 1 + z^(2k+2)
        ratio = num * _nr_reciprocal(den)
    if log_bound is not None:
        # infiniteBound > 0: fold the scale into the exponent (saves one vmul).
        y = x * jnp.exp(ratio + log_bound)
    else:
        y = infinite_bound * x * jnp.exp(ratio)
    o_ref[...] = y.astype(o_ref.dtype)


def _bounded_exp_jnp(x, *, decay_constant, inv_region, infinite_bound):
    """Plain-JAX fallback (used for the ragged <cols tail and as reference)."""
    xf = x.astype(jnp.float32)
    z = xf * inv_region
    num = z ** (2 * decay_constant)
    den = 1.0 + z ** (2 * decay_constant + 2)
    return (infinite_bound * xf * jnp.exp(num / den)).astype(x.dtype)


def _pick_cols(n):
    """Lane-dense column width. Prefer the largest divisor of n (no tail)."""
    c = _LANE * _MAX_LANE_MULT
    while c >= _LANE:
        if n % c == 0:
            return c
        c //= 2
    # Ragged: widest power-of-two multiple of 128 that fits; the <cols
    # remainder is handled outside the kernel.
    c = _LANE
    while c * 2 <= min(n, _LANE * _MAX_LANE_MULT):
        c *= 2
    return c


def _pick_block_rows(rows, cols, itemsize):
    """Block rows targeting ~4 MiB/buffer, >=4 grid steps when data allows."""
    sub = {4: 8, 2: 16, 1: 32}.get(itemsize, 8)   # sublane packing per dtype
    br = max(sub, (_TARGET_TILE_BYTES // (cols * itemsize)) // sub * sub)
    br = min(br, rows)
    # >= 2 blocks per TensorCore on 2-TC chips (v7x) so each core pipelines;
    # the couple of extra steps this costs on 1-TC chips is negligible.
    if rows >= 4 * sub:
        min_grid = 4
    elif rows >= 2 * sub:
        min_grid = 2
    else:
        min_grid = 1
    if min_grid > 1 and -(-rows // br) < min_grid:
        br = max(sub, (rows // min_grid) // sub * sub)
        br = min(br, rows)
    grid = -(-rows // br)
    return br, grid


def bounded_exp(x, *, decayConstant=0, nonLinearityRegion=2,
                infiniteBound=math.exp(-0.5)):
    assert isinstance(decayConstant, int), "decayConstant must be an integer"
    assert 0 < abs(infiniteBound) <= 1
    assert 0 < nonLinearityRegion
    assert 0 <= decayConstant

    orig_shape = x.shape
    orig_dtype = x.dtype
    n = x.size
    itemsize = jnp.dtype(orig_dtype).itemsize

    params = dict(
        decay_constant=int(decayConstant),
        inv_region=float(1.0 / nonLinearityRegion),
        infinite_bound=float(infiniteBound),
    )

    x_flat = jnp.ravel(x)

    # Tiny inputs (< one lane) are not worth a kernel launch.
    if n < _LANE:
        return _bounded_exp_jnp(x_flat, **params).reshape(orig_shape)

    cols = _pick_cols(n)
    rows = n // cols
    bulk = rows * cols
    tail = n - bulk                      # 0 in the common (divisible) case

    block_rows, grid = _pick_block_rows(rows, cols, itemsize)

    log_bound = math.log(infiniteBound) if infiniteBound > 0 else None
    kernel = functools.partial(_bounded_exp_kernel, log_bound=log_bound,
                               **params)

    k = int(decayConstant)
    flops_per_elem = 10 + 4 * k          # muls/adds incl. NR reciprocal
    x2d = (x_flat if tail == 0 else x_flat[:bulk]).reshape(rows, cols)

    out2d = pl.pallas_call(
        kernel,
        out_shape=jax.ShapeDtypeStruct((rows, cols), orig_dtype),
        grid_spec=pltpu.PrefetchScalarGridSpec(
            num_scalar_prefetch=0,
            grid=(grid,),
            in_specs=[pl.BlockSpec((block_rows, cols), lambda i: (i, 0))],
            out_specs=pl.BlockSpec((block_rows, cols), lambda i: (i, 0)),
        ),
        compiler_params=pltpu.CompilerParams(
            dimension_semantics=("parallel",),
            vmem_limit_bytes=32 * 1024 * 1024),
        cost_estimate=pl.CostEstimate(
            flops=flops_per_elem * bulk,
            transcendentals=2 * bulk,
            bytes_accessed=2 * bulk * itemsize),
    )(x2d)

    out_flat = out2d.reshape(-1)
    if tail:
        # The tail is < cols (<= 8191) elements: finish it with plain jnp
        # rather than padding + re-slicing the whole tensor.
        out_tail = _bounded_exp_jnp(x_flat[bulk:], **params)
        out_flat = jnp.concatenate([out_flat, out_tail])
    return out_flat.reshape(orig_shape)


def bounded_exp_ref(x, *, decayConstant=0, nonLinearityRegion=2,
                    infiniteBound=math.exp(-0.5)):
    return _bounded_exp_jnp(
        x,
        decay_constant=int(decayConstant),
        inv_region=float(1.0 / nonLinearityRegion),
        infinite_bound=float(infiniteBound),
    )


if __name__ == "__main__":
    key = jax.random.PRNGKey(0)
    # NCHW-shaped input, as the PyTorch module would typically receive.
    x = jax.random.normal(key, (2, 4, 16, 16), dtype=jnp.float32) * 3.0

    out = jax.block_until_ready(bounded_exp(x))
    ref = bounded_exp_ref(x)
    assert out.shape == x.shape and out.dtype == x.dtype
    assert jnp.allclose(out, ref, atol=1e-5, rtol=1e-5), \
        f"max abs err {jnp.max(jnp.abs(out - ref))}"

    # Ragged size + decayConstant >= 1 path (exercises the bulk/tail split and
    # the integer-power branch).
    x2 = jax.random.normal(jax.random.PRNGKey(0), (2, 3, 7, 5),
                           dtype=jnp.float32) * 2.0
    out2 = jax.block_until_ready(bounded_exp(x2, decayConstant=1))
    ref2 = bounded_exp_ref(x2, decayConstant=1)
    assert out2.shape == x2.shape and out2.dtype == x2.dtype
    assert jnp.allclose(out2, ref2, atol=1e-5, rtol=1e-5), \
        f"max abs err {jnp.max(jnp.abs(out2 - ref2))}"

    print("KERNEL_OK")
</pallas_src>

<mosaic_0001>
module attributes {stable_mosaic.version = 11 : i64} {
  func.func @_bounded_exp_kernel(%arg0: i32, %arg1: memref<1x2048xf32, #tpu.memory_space<vmem>>, %arg2: memref<1x2048xf32, #tpu.memory_space<vmem>>) attributes {dimension_semantics = [#tpu.dimension_semantics<parallel>], iteration_bounds = array<i64: 1>, scalar_prefetch = 0 : i64, scratch_operands = 0 : i64, tpu.core_type = #tpu.core_type<tc>, window_params = [{transform_indices = @transform_0, window_bounds = array<i64: 1, 2048>}, {transform_indices = @transform_1, window_bounds = array<i64: 1, 2048>}]} {
    %c0 = arith.constant 0 : index
    %c0_0 = arith.constant 0 : index
    %0 = vector.load %arg1[%c0, %c0_0] : memref<1x2048xf32, #tpu.memory_space<vmem>>, vector<1x2048xf32>
    %cst = arith.constant 5.000000e-01 : f32
    %1 = vector.broadcast %cst : f32 to vector<1x2048xf32>
    %2 = arith.mulf %0, %1 : vector<1x2048xf32>
    %3 = arith.mulf %2, %2 : vector<1x2048xf32>
    %cst_1 = arith.constant 1.000000e+00 : f32
    %4 = vector.broadcast %cst_1 : f32 to vector<1x2048xf32>
    %5 = arith.addf %4, %3 : vector<1x2048xf32>
    %6 = tpu.reciprocal %5 {approx = true} : vector<1x2048xf32> -> vector<1x2048xf32>
    %7 = arith.mulf %5, %6 : vector<1x2048xf32>
    %cst_2 = arith.constant 2.000000e+00 : f32
    %8 = vector.broadcast %cst_2 : f32 to vector<1x2048xf32>
    %9 = arith.subf %8, %7 : vector<1x2048xf32>
    %10 = arith.mulf %6, %9 : vector<1x2048xf32>
    %cst_3 = arith.constant -5.000000e-01 : f32
    %11 = vector.broadcast %cst_3 : f32 to vector<1x2048xf32>
    %12 = arith.addf %10, %11 : vector<1x2048xf32>
    %13 = math.exp %12 : vector<1x2048xf32>
    %14 = arith.mulf %0, %13 : vector<1x2048xf32>
    %c0_4 = arith.constant 0 : index
    %c0_5 = arith.constant 0 : index
    %15 = vector.load %arg2[%c0_4, %c0_5] : memref<1x2048xf32, #tpu.memory_space<vmem>>, vector<1x2048xf32>
    tpu.vector_store %arg2[%c0_4, %c0_5], %14 {strides = array<i32>} : memref<1x2048xf32, #tpu.memory_space<vmem>>, vector<1x2048xf32>,
    return
  }
  func.func @transform_0(%arg0: i32) -> (i32, i32) {
    %c0_i32 = arith.constant 0 : i32
    %c0_i32_0 = arith.constant 0 : i32
    return %arg0, %c0_i32 : i32, i32
  }
  func.func @transform_1(%arg0: i32) -> (i32, i32) {
    %c0_i32 = arith.constant 0 : i32
    %c0_i32_0 = arith.constant 0 : i32
    return %arg0, %c0_i32 : i32, i32
  }
}

</mosaic_0001>

<llo_original>
// kernel: tpu_custom_call.1
$region0: #{tpu_custom_call.1}
  #allocation0 [shape = 'u32[]', space=smem, size = 0x4, offset = 0x4, fixed_abs, tag = 'smem constant byte address 0x4 - core index']
  #allocation1 [shape = 'u32[144,128]{1,0:T(1,128)}', space=vmem, size = 0x12000, scoped, tag = 'internal scratch']
  %s0 = inlined_call_operand.hbm [shape: f32[1,2048], index: 0, kind: input, shape index: {}]
  %s1 = inlined_call_operand.hbm [shape: f32[1,2048], index: 1, kind: output, shape index: {}]
  %s2 = sld [smem:[#allocation0]]
  $region18: #{tpu_custom_call.1} parent=0
    _
  %s4 = ssub.s32 1, %s2
  %s5 = scalar_select 0, %s4, %s2
  $region1: #{tpu_custom_call.1} parent=0
    #allocation2 [shape = 'u8[8192]{0}', space=vmem, size = 0x2000, scoped, tag = 'input window, operand 0, single buffered']
    #allocation3 [shape = 's32[1]{0}', space=sflag, size = 0x4, scoped, tag = 'scoped memory for tpu_custom_call.1']
    #allocation4 [shape = 's32[1]{0}', space=sflag, size = 0x4, scoped, tag = 'scoped memory for tpu_custom_call.1']
    #allocation5 [shape = 'u8[8192]{0}', space=vmem, size = 0x2000, scoped, tag = 'output window, operand 0, single buffered']
    %6 = vsyncpa [#allocation3], 0
    %7 = vsyncpa [#allocation4], 0
    // Predicated region
    $region2: #{tpu_custom_call.1} parent=1 // pred_check
      _
    $region3: #{tpu_custom_call.1} parent=1 // pred_check_branch
      %9 = sbr.rel (0) target = $region5
    $region4: #{tpu_custom_call.1} parent=1 // pred_region
      %s11 = ssub.s32 256, 256
      %12 = vsyncadd [#allocation3], %s11
      %s14 = sshll.u32 [#allocation2], 4
      %s15 = int_to_ptr.vmem [resolvable:$true] %s14
      %17 = dma.hbm_to_vmem [thread:$0]  %s0, 256, %s15, [#allocation3]
    $region5: #{tpu_custom_call.1} parent=1 // pred_fallthru
      _
    // Predicated region
    $region6: #{tpu_custom_call.1} parent=1 // pred_check
      _
    $region7: #{tpu_custom_call.1} parent=1 // pred_check_branch
      %19 = sbr.rel (0) target = $region9
    $region8: #{tpu_custom_call.1} parent=1 // pred_region
      %20 = dma.done [#allocation3], 256
    $region9: #{tpu_custom_call.1} parent=1 // pred_fallthru
      _
    %v21 = vld [vmem:[#allocation2] sm:$0xff]
    %v22 = vld [vmem:[#allocation2 + $0x8] sm:$0xff]
    %v23 = vmul.f32 %v21, 0.5
    %v24 = vmul.f32 %v22, 0.5
    %v25 = vmul.f32 %v23, %v23
    %v26 = vmul.f32 %v24, %v24
    %v27 = vadd.f32 %v25, 1.0
    %v28 = vadd.f32 %v26, 1.0
    %v29 = vrcp.pop %v27
    %v30 = vrcp.pop %v28
    %v31 = vmul.f32 %v27, %v29
    %v32 = vmul.f32 %v28, %v30
    %v33 = vsub.f32 2.0, %v31
    %v34 = vsub.f32 2.0, %v32
    %v35 = vmul.f32 %v29, %v33
    %v36 = vmul.f32 %v30, %v34
    %v37 = vadd.f32 %v35, -0.5
    %v38 = vadd.f32 %v36, -0.5
    %v39 = vmul.f32 %v37, 1.442695
    %v40 = vpow.pop %v39
    %v41 = vmul.f32 %v38, 1.442695
    %v42 = vpow.pop %v41
    %v43 = vmul.f32 %v21, %v40
    %v44 = vmul.f32 %v22, %v42
    %45 = vst [vmem:[#allocation5] sm:$0xff] %v43
    %46 = vst [vmem:[#allocation5 + $0x8] sm:$0xff] %v44
    // Predicated region
    $region10: #{tpu_custom_call.1} parent=1 // pred_check
      _
    $region11: #{tpu_custom_call.1} parent=1 // pred_check_branch
      %48 = sbr.rel (0) target = $region13
    $region12: #{tpu_custom_call.1} parent=1 // pred_region
      %s50 = ssub.s32 256, 256
      %51 = vsyncadd [#allocation4], %s50
      %s53 = sshll.u32 [#allocation5], 4
      %s54 = int_to_ptr.vmem [resolvable:$true] %s53
      %56 = dma.vmem_to_hbm [thread:$0]  %s54, 256, %s1, [#allocation4]
    $region13: #{tpu_custom_call.1} parent=1 // pred_fallthru
      _
    // Predicated region
    $region14: #{tpu_custom_call.1} parent=1 // pred_check
      _
    $region15: #{tpu_custom_call.1} parent=1 // pred_check_branch
      %58 = sbr.rel (0) target = $region17
    $region16: #{tpu_custom_call.1} parent=1 // pred_region
      %59 = dma.done [#allocation4], 256
    $region17: #{tpu_custom_call.1} parent=1 // pred_fallthru
      _
    %60 = vsyncpa [#allocation3], 1
    %61 = vsyncpa [#allocation4], 1

</llo_original>
